<compile_context>
chip_gen: v6e
topology: v6e:2x2x1
jax: 0.10.0
libtpu: 0.0.40
codegen_flags: <defaults>
</compile_context>

<pallas_src>
import math
from functools import partial

import jax
import jax.numpy as jnp
from jax.experimental import pallas as pl
from jax.experimental.pallas import tpu as pltpu


# ---------------------------------------------------------------------------
# Kernel
# ---------------------------------------------------------------------------
def _lora_linear_kernel(x_ref, w0t_ref, wat_ref, wbt_ref, b_ref, o_ref,
                        *scratch, scaling, k_valid, mask_k_tail, acc_in_out):
    """One (i, j, k) grid step of y = x @ W0^T + b + scaling*(x @ wA^T) @ wB^T.

    Grid: (i over M tiles, j over D tiles, k over K tiles).  k is the innermost
    reduction; the output block index is independent of k so the accumulator
    stays VMEM-resident across the reduction.  The LoRA A-path accumulator
    (tm, r) is computed only at j == 0 and persists across j for the same i.
    """
    j = pl.program_id(1)
    k = pl.program_id(2)

    if acc_in_out:                 # f32 output: use the output as accumulator
        (ax_ref,) = scratch
        acc_ref = o_ref
    else:
        acc_ref, ax_ref = scratch

    x = x_ref[...]
    w0t = w0t_ref[...]
    wat = wat_ref[...]

    if mask_k_tail:
        # The last K block extends past the array; zero the out-of-range slice
        # on BOTH operands so padding garbage can never reach the accumulator.
        tk = x.shape[1]
        col_ids = jax.lax.broadcasted_iota(jnp.int32, (1, tk), 1) + k * tk
        row_ids = jax.lax.broadcasted_iota(jnp.int32, (tk, 1), 0) + k * tk
        x = jnp.where(col_ids < k_valid, x, 0)
        w0t = jnp.where(row_ids < k_valid, w0t, 0)
        wat = jnp.where(row_ids < k_valid, wat, 0)

    @pl.when(k == 0)
    def _init_acc():
        # Fold the bias into the accumulator init (saves a VPU pass later).
        acc_ref[...] = jnp.broadcast_to(
            b_ref[...].astype(acc_ref.dtype), acc_ref.shape)

    @pl.when(jnp.logical_and(j == 0, k == 0))
    def _init_ax():
        ax_ref[...] = jnp.zeros_like(ax_ref)

    # Base path contribution of this K slice: (tm, tk) @ (tk, tn) -> f32 acc.
    acc_ref[...] += jnp.dot(x, w0t, preferred_element_type=jnp.float32)

    # LoRA A-path: computed only on the first j pass of this i-tile (the
    # (tm, r) scratch persists and is reused for every j of the same i).
    @pl.when(j == 0)
    def _a_path():
        ax_ref[...] += jnp.dot(x, wat, preferred_element_type=jnp.float32)

    @pl.when(k == pl.num_programs(2) - 1)
    def _finalize():
        # Scale the tiny (tm, r) intermediate, not the (tm, tn) output tile.
        ax = ax_ref[...] * jnp.float32(scaling)
        wbt = wbt_ref[...]
        if wbt.dtype != jnp.float32:      # avoid a f32->f32 round-trip copy
            ax = ax.astype(wbt.dtype)
        lora = jnp.dot(ax, wbt, preferred_element_type=jnp.float32)
        if acc_in_out:
            o_ref[...] += lora
        else:
            o_ref[...] = (acc_ref[...] + lora).astype(o_ref.dtype)


# ---------------------------------------------------------------------------
# Tile selection
# ---------------------------------------------------------------------------
def _sublane_granule(dtype):
    # f32 -> 8, bf16 -> 16, int8/fp8 -> 32 (sub-32-bit packs along sublanes).
    return 8 * max(1, 4 // jnp.dtype(dtype).itemsize)


def _pick_m_tile(m, target, granule):
    if m <= max(target, granule):
        return m                                  # full dim is always legal
    return max(granule, (target // granule) * granule)


def _pick_n_tile(n, target):
    if n <= max(target, 128):
        return n
    return max(128, (target // 128) * 128)        # ragged tail masked on store


def _pick_k_tile(k, target):
    target = max(128, (target // 128) * 128)
    if k <= target:
        return k, False
    # Prefer an exact 128-multiple divisor reasonably close to the target.
    tk = target
    while tk >= max(128, target // 2):
        if k % tk == 0:
            return tk, False
        tk -= 128
    # Otherwise keep the target tile and mask the ragged tail in-kernel.
    return target, True


def _choose_tiles(M, K, D, r, x_dtype, w_dtype, out_dtype,
                  tm, tn, tk, vmem_budget):
    gm = _sublane_granule(x_dtype)
    tm = _pick_m_tile(M, tm, gm)
    tn = _pick_n_tile(D, tn)
    tk, mask_k = _pick_k_tile(K, tk)

    bx = jnp.dtype(x_dtype).itemsize
    bw = jnp.dtype(w_dtype).itemsize
    bo = jnp.dtype(out_dtype).itemsize
    acc_in_out = jnp.dtype(out_dtype) == jnp.float32

    def est(tm_, tn_, tk_):
        ins = (tm_ * tk_ * bx + tk_ * tn_ * bw + tk_ * r * bw
               + r * tn_ * bw + tn_ * bw)
        outs = tm_ * tn_ * bo
        scratch = tm_ * r * 4 + (0 if acc_in_out else tm_ * tn_ * 4)
        return 2 * (ins + outs) + scratch         # BlockSpec double-buffers I/O

    # Shrink tk -> tn -> tm until the double-buffered working set fits.
    while est(tm, tn, tk) > vmem_budget:
        if tk > 256:
            tk = max(256, ((tk // 2) // 128) * 128)
            mask_k = (K % tk) != 0 and K > tk
            continue
        if tn > 128:
            tn = max(128, ((tn // 2) // 128) * 128)
            continue
        if tm > gm:
            tm = max(gm, ((tm // 2) // gm) * gm)
            continue
        break

    return tm, tn, tk, mask_k, est(tm, tn, tk)


# ---------------------------------------------------------------------------
# Wrappers
# ---------------------------------------------------------------------------
def prepare_lora_linear_params(w0, wa, wb, b=None, *, compute_dtype=None):
    """One-time weight preparation.  Call at weight-load time, NOT per forward.

    Transposes W0/wA/wB into MXU-natural (K, D)/(K, r)/(r, D) layouts (and
    optionally casts to a compute dtype such as bf16) so the forward pass pays
    no per-call HBM transpose and the kernel never relayouts a weight tile.
    """
    if compute_dtype is not None:
        w0 = w0.astype(compute_dtype)
        wa = wa.astype(compute_dtype)
        wb = wb.astype(compute_dtype)
    D, _K = w0.shape
    if b is None:
        b = jnp.zeros((D,), w0.dtype)
    return {
        "w0_t": w0.T,                  # (K, D)
        "wa_t": wa.T,                  # (K, r)
        "wb_t": wb.T,                  # (r, D)
        "b2d": b.reshape(1, D),        # (1, D)
    }


def lora_linear_apply(x, params, *, alpha=1.0, rank=None,
                      tm=512, tn=512, tk=1024,
                      vmem_budget_bytes=24 * 1024 * 1024,
                      out_dtype=None):
    """Fused LoRA-linear forward from pre-transposed params.

    x : (M, K); params from prepare_lora_linear_params().
    returns (M, D) = x @ W0^T + b + (alpha / r) * (x @ wA^T) @ wB^T
    """
    w0_t, wa_t, wb_t, b2d = (params["w0_t"], params["wa_t"],
                             params["wb_t"], params["b2d"])
    M, K = x.shape
    Kw, D = w0_t.shape
    assert K == Kw, "x / W0 contraction dims disagree"
    r = wa_t.shape[1] if rank is None else rank
    scaling = alpha / r                       # wB exists -> scale by alpha / r
    out_dtype = x.dtype if out_dtype is None else jnp.dtype(out_dtype)
    acc_in_out = jnp.dtype(out_dtype) == jnp.float32

    tm, tn, tk, mask_k, est = _choose_tiles(
        M, K, D, r, x.dtype, w0_t.dtype, out_dtype, tm, tn, tk,
        vmem_budget_bytes)

    grid = (pl.cdiv(M, tm), pl.cdiv(D, tn), pl.cdiv(K, tk))  # K reduction last

    kernel = partial(_lora_linear_kernel, scaling=scaling, k_valid=K,
                     mask_k_tail=mask_k, acc_in_out=acc_in_out)

    scratch_shapes = [pltpu.VMEM((tm, r), jnp.float32)]       # x @ wA^T acc
    if not acc_in_out:
        scratch_shapes = [pltpu.VMEM((tm, tn), jnp.float32)] + scratch_shapes

    # Right-size the scoped VMEM limit to actual usage (>= 32 MiB default).
    vmem_limit = int(max(32 * 1024 * 1024, est + est // 4))

    return pl.pallas_call(
        kernel,
        out_shape=jax.ShapeDtypeStruct((M, D), out_dtype),
        grid_spec=pltpu.PrefetchScalarGridSpec(
            num_scalar_prefetch=0,
            grid=grid,
            in_specs=[
                pl.BlockSpec((tm, tk), lambda i, j, k: (i, k)),   # x tile
                pl.BlockSpec((tk, tn), lambda i, j, k: (k, j)),   # W0^T tile
                pl.BlockSpec((tk, r), lambda i, j, k: (k, 0)),    # wA^T tile
                pl.BlockSpec((r, tn), lambda i, j, k: (0, j)),    # wB^T tile
                pl.BlockSpec((1, tn), lambda i, j, k: (0, j)),    # bias tile
            ],
            out_specs=pl.BlockSpec((tm, tn), lambda i, j, k: (i, j)),
            scratch_shapes=scratch_shapes,
        ),
        compiler_params=pltpu.CompilerParams(
            # i is the only parallel axis: the persistent (tm, r) A-path
            # scratch requires every core to visit j == 0 for each i, and k is
            # the reduction -> both stay "arbitrary".  On v7x this shards M
            # tiles across the 2 TensorCores; on v5e/v6e it is a no-op.
            dimension_semantics=("parallel", "arbitrary", "arbitrary"),
            vmem_limit_bytes=vmem_limit,
        ),
    )(x, w0_t, wa_t, wb_t, b2d)


def lora_linear(x, w0, wa, wb, b, *, alpha=1.0, rank=None, **kwargs):
    """Convenience wrapper (transposes weights per call).  For repeated forward
    passes prefer prepare_lora_linear_params() once + lora_linear_apply()."""
    params = prepare_lora_linear_params(w0, wa, wb, b)
    return lora_linear_apply(x, params, alpha=alpha, rank=rank, **kwargs)


# ---------------------------------------------------------------------------
# Self-test
# ---------------------------------------------------------------------------
if __name__ == "__main__":
    key = jax.random.PRNGKey(0)
    keys = jax.random.split(key, 14)

    # ---- Test 1: module-faithful small shapes, reset_parameters() state ----
    batch, seq, hidden = 2, 8, 32              # in_features = out_features = 32
    rank, alpha = 8, 1.0                       # rank <= d*k/(d+k)=16 -> A & B
    M, K, D = batch * seq, hidden, hidden

    x = jax.random.normal(keys[0], (M, K), dtype=jnp.float32)
    w0 = jax.random.normal(keys[1], (D, K), dtype=jnp.float32) * 0.1
    bias = jax.random.normal(keys[2], (D,), dtype=jnp.float32) * 0.1
    bound = math.sqrt(6.0 / (K + rank))        # xavier_uniform on wA
    wa = jax.random.uniform(keys[3], (rank, K), dtype=jnp.float32,
                            minval=-bound, maxval=bound)
    wb = jnp.zeros((D, rank), dtype=jnp.float32)   # reset_parameters(): wB = 0

    params = prepare_lora_linear_params(w0, wa, wb, bias)   # one-time prep
    y = jax.block_until_ready(
        lora_linear_apply(x, params, alpha=alpha, rank=rank))
    y_ref = x @ w0.T + bias[None, :] + (alpha / rank) * ((x @ wa.T) @ wb.T)
    assert jnp.allclose(y, y_ref, atol=1e-4, rtol=1e-4), "test1 mismatch"

    # ---- Test 2: multi-tile i/j/k path (ragged M and D) + nonzero wB --------
    M2, K2, D2, r2, alpha2 = 272, 256, 384, 16, 2.0
    x2 = jax.random.normal(keys[4], (M2, K2), dtype=jnp.float32)
    w02 = jax.random.normal(keys[5], (D2, K2), dtype=jnp.float32) * 0.04
    b2 = jax.random.normal(keys[6], (D2,), dtype=jnp.float32) * 0.5
    bound2 = math.sqrt(6.0 / (K2 + r2))
    wa2 = jax.random.uniform(keys[7], (r2, K2), dtype=jnp.float32,
                             minval=-bound2, maxval=bound2)
    wb2 = jax.random.normal(keys[8], (D2, r2), dtype=jnp.float32) * 0.1

    params2 = prepare_lora_linear_params(w02, wa2, wb2, b2)
    y2 = jax.block_until_ready(
        lora_linear_apply(x2, params2, alpha=alpha2, rank=r2,
                          tm=128, tn=256, tk=128))
    y2_ref = (x2 @ w02.T + b2[None, :]
              + (alpha2 / r2) * ((x2 @ wa2.T) @ wb2.T))
    assert jnp.allclose(y2, y2_ref, atol=2e-2, rtol=2e-2), "test2 mismatch"

    # ---- Test 3: bf16 compute + masked ragged-K reduction -------------------
    M3, K3, D3, r3, alpha3 = 64, 320, 256, 8, 1.5
    x3 = (jax.random.normal(keys[9], (M3, K3), dtype=jnp.float32) * 0.5
          ).astype(jnp.bfloat16)
    w03 = (jax.random.normal(keys[10], (D3, K3), dtype=jnp.float32) * 0.05
           ).astype(jnp.bfloat16)
    b3 = (jax.random.normal(keys[11], (D3,), dtype=jnp.float32) * 0.2
          ).astype(jnp.bfloat16)
    wa3 = (jax.random.normal(keys[12], (r3, K3), dtype=jnp.float32) * 0.05
           ).astype(jnp.bfloat16)
    wb3 = (jax.random.normal(keys[13], (D3, r3), dtype=jnp.float32) * 0.1
           ).astype(jnp.bfloat16)

    params3 = prepare_lora_linear_params(w03, wa3, wb3, b3)
    y3 = jax.block_until_ready(
        lora_linear_apply(x3, params3, alpha=alpha3, rank=r3, tk=128))
    x3f, w03f = x3.astype(jnp.float32), w03.astype(jnp.float32)
    wa3f, wb3f = wa3.astype(jnp.float32), wb3.astype(jnp.float32)
    y3_ref = (x3f @ w03f.T + b3.astype(jnp.float32)[None, :]
              + (alpha3 / r3) * ((x3f @ wa3f.T) @ wb3f.T))
    assert jnp.allclose(y3.astype(jnp.float32), y3_ref,
                        atol=5e-2, rtol=5e-2), "test3 mismatch"

    # TODO(synk): the degenerate branch (rank > d*k/(d+k): a single full-size
    # zero wA, forward = base + alpha * x @ wA^T) is not given its own kernel;
    # it is just a second full-rank linear added to the base path.  The
    # adapt/merge/unmerge/detach machinery is host-side bookkeeping with no
    # Pallas equivalent.
    print("KERNEL_OK")
</pallas_src>

<mosaic_0001>
module attributes {stable_mosaic.version = 11 : i64} {
  func.func @_lora_linear_kernel(%arg0: i32, %arg1: i32, %arg2: i32, %arg3: memref<16x32xf32, #tpu.memory_space<vmem>>, %arg4: memref<32x32xf32, #tpu.memory_space<vmem>>, %arg5: memref<32x8xf32, #tpu.memory_space<vmem>>, %arg6: memref<8x32xf32, #tpu.memory_space<vmem>>, %arg7: memref<1x32xf32, #tpu.memory_space<vmem>>, %arg8: memref<16x32xf32, #tpu.memory_space<vmem>>, %arg9: memref<16x8xf32, #tpu.memory_space<vmem>>) attributes {dimension_semantics = [#tpu.dimension_semantics<parallel>, #tpu.dimension_semantics<arbitrary>, #tpu.dimension_semantics<arbitrary>], iteration_bounds = array<i64: 1, 1, 1>, scalar_prefetch = 0 : i64, scratch_operands = 1 : i64, tpu.core_type = #tpu.core_type<tc>, window_params = [{transform_indices = @transform_0, window_bounds = array<i64: 16, 32>}, {transform_indices = @transform_1, window_bounds = array<i64: 32, 32>}, {transform_indices = @transform_2, window_bounds = array<i64: 32, 8>}, {transform_indices = @transform_3, window_bounds = array<i64: 8, 32>}, {transform_indices = @transform_4, window_bounds = array<i64: 1, 32>}, {transform_indices = @transform_5, window_bounds = array<i64: 16, 32>}]} {
    %c0 = arith.constant 0 : index
    %c0_0 = arith.constant 0 : index
    %0 = vector.load %arg3[%c0, %c0_0] : memref<16x32xf32, #tpu.memory_space<vmem>>, vector<16x32xf32>
    %c0_1 = arith.constant 0 : index
    %c0_2 = arith.constant 0 : index
    %1 = vector.load %arg4[%c0_1, %c0_2] : memref<32x32xf32, #tpu.memory_space<vmem>>, vector<32x32xf32>
    %c0_3 = arith.constant 0 : index
    %c0_4 = arith.constant 0 : index
    %2 = vector.load %arg5[%c0_3, %c0_4] : memref<32x8xf32, #tpu.memory_space<vmem>>, vector<32x8xf32>
    %c0_i32 = arith.constant 0 : i32
    %3 = arith.cmpi eq, %arg2, %c0_i32 : i32
    %4 = arith.extui %3 : i1 to i32
    %c0_i32_5 = arith.constant 0 : i32
    %5 = arith.cmpi ne, %4, %c0_i32_5 : i32
    scf.if %5 {
      %c0_17 = arith.constant 0 : index
      %c0_18 = arith.constant 0 : index
      %21 = vector.load %arg7[%c0_17, %c0_18] : memref<1x32xf32, #tpu.memory_space<vmem>>, vector<1x32xf32>
      %22 = vector.shape_cast %21 : vector<1x32xf32> to vector<1x32xf32>
      %23 = vector.broadcast %22 : vector<1x32xf32> to vector<16x32xf32>
      %c0_19 = arith.constant 0 : index
      %c0_20 = arith.constant 0 : index
      %24 = vector.load %arg8[%c0_19, %c0_20] : memref<16x32xf32, #tpu.memory_space<vmem>>, vector<16x32xf32>
      tpu.vector_store %arg8[%c0_19, %c0_20], %23 {strides = array<i32>} : memref<16x32xf32, #tpu.memory_space<vmem>>, vector<16x32xf32>,
    } else {
    }
    %c0_i32_6 = arith.constant 0 : i32
    %6 = arith.cmpi eq, %arg1, %c0_i32_6 : i32
    %c0_i32_7 = arith.constant 0 : i32
    %7 = arith.cmpi eq, %arg2, %c0_i32_7 : i32
    %8 = arith.andi %6, %7 : i1
    %9 = arith.extui %8 : i1 to i32
    %c0_i32_8 = arith.constant 0 : i32
    %10 = arith.cmpi ne, %9, %c0_i32_8 : i32
    scf.if %10 {
      %cst_17 = arith.constant 0.000000e+00 : f32
      %21 = vector.broadcast %cst_17 : f32 to vector<16x8xf32>
      %c0_18 = arith.constant 0 : index
      %c0_19 = arith.constant 0 : index
      %22 = vector.load %arg9[%c0_18, %c0_19] : memref<16x8xf32, #tpu.memory_space<vmem>>, vector<16x8xf32>
      tpu.vector_store %arg9[%c0_18, %c0_19], %21 {strides = array<i32>} : memref<16x8xf32, #tpu.memory_space<vmem>>, vector<16x8xf32>,
    } else {
    }
    %c0_9 = arith.constant 0 : index
    %c0_10 = arith.constant 0 : index
    %11 = vector.load %arg8[%c0_9, %c0_10] : memref<16x32xf32, #tpu.memory_space<vmem>>, vector<16x32xf32>
    %cst = arith.constant dense<0.000000e+00> : vector<16x32xf32>
    %12 = tpu.matmul %0, %1, %cst {dimension_numbers = #tpu.dot_dimension_numbers<[1], [0], [0], [1], [0, 0, 1, 1], [], []>} : vector<16x32xf32>, vector<32x32xf32>, vector<16x32xf32> -> vector<16x32xf32>
    %13 = arith.addf %11, %12 : vector<16x32xf32>
    %c0_11 = arith.constant 0 : index
    %c0_12 = arith.constant 0 : index
    %14 = vector.load %arg8[%c0_11, %c0_12] : memref<16x32xf32, #tpu.memory_space<vmem>>, vector<16x32xf32>
    tpu.vector_store %arg8[%c0_11, %c0_12], %13 {strides = array<i32>} : memref<16x32xf32, #tpu.memory_space<vmem>>, vector<16x32xf32>,
    %c0_i32_13 = arith.constant 0 : i32
    %15 = arith.cmpi eq, %arg1, %c0_i32_13 : i32
    %16 = arith.extui %15 : i1 to i32
    %c0_i32_14 = arith.constant 0 : i32
    %17 = arith.cmpi ne, %16, %c0_i32_14 : i32
    scf.if %17 {
      %c0_17 = arith.constant 0 : index
      %c0_18 = arith.constant 0 : index
      %21 = vector.load %arg9[%c0_17, %c0_18] : memref<16x8xf32, #tpu.memory_space<vmem>>, vector<16x8xf32>
      %cst_19 = arith.constant dense<0.000000e+00> : vector<16x8xf32>
      %22 = tpu.matmul %0, %2, %cst_19 {dimension_numbers = #tpu.dot_dimension_numbers<[1], [0], [0], [1], [0, 0, 1, 1], [], []>} : vector<16x32xf32>, vector<32x8xf32>, vector<16x8xf32> -> vector<16x8xf32>
      %23 = arith.addf %21, %22 : vector<16x8xf32>
      %c0_20 = arith.constant 0 : index
      %c0_21 = arith.constant 0 : index
      %24 = vector.load %arg9[%c0_20, %c0_21] : memref<16x8xf32, #tpu.memory_space<vmem>>, vector<16x8xf32>
      tpu.vector_store %arg9[%c0_20, %c0_21], %23 {strides = array<i32>} : memref<16x8xf32, #tpu.memory_space<vmem>>, vector<16x8xf32>,
    } else {
    }
    %c0_i32_15 = arith.constant 0 : i32
    %18 = arith.cmpi eq, %arg2, %c0_i32_15 : i32
    %19 = arith.extui %18 : i1 to i32
    %c0_i32_16 = arith.constant 0 : i32
    %20 = arith.cmpi ne, %19, %c0_i32_16 : i32
    scf.if %20 {
      %c0_17 = arith.constant 0 : index
      %c0_18 = arith.constant 0 : index
      %21 = vector.load %arg9[%c0_17, %c0_18] : memref<16x8xf32, #tpu.memory_space<vmem>>, vector<16x8xf32>
      %cst_19 = arith.constant 1.250000e-01 : f32
      %22 = vector.broadcast %cst_19 : f32 to vector<16x8xf32>
      %23 = arith.mulf %21, %22 : vector<16x8xf32>
      %c0_20 = arith.constant 0 : index
      %c0_21 = arith.constant 0 : index
      %24 = vector.load %arg6[%c0_20, %c0_21] : memref<8x32xf32, #tpu.memory_space<vmem>>, vector<8x32xf32>
      %cst_22 = arith.constant dense<0.000000e+00> : vector<16x32xf32>
      %25 = tpu.matmul %23, %24, %cst_22 {dimension_numbers = #tpu.dot_dimension_numbers<[1], [0], [0], [1], [0, 0, 1, 1], [], []>} : vector<16x8xf32>, vector<8x32xf32>, vector<16x32xf32> -> vector<16x32xf32>
      %c0_23 = arith.constant 0 : index
      %c0_24 = arith.constant 0 : index
      %26 = vector.load %arg8[%c0_23, %c0_24] : memref<16x32xf32, #tpu.memory_space<vmem>>, vector<16x32xf32>
      %27 = arith.addf %26, %25 : vector<16x32xf32>
      %c0_25 = arith.constant 0 : index
      %c0_26 = arith.constant 0 : index
      %28 = vector.load %arg8[%c0_25, %c0_26] : memref<16x32xf32, #tpu.memory_space<vmem>>, vector<16x32xf32>
      tpu.vector_store %arg8[%c0_25, %c0_26], %27 {strides = array<i32>} : memref<16x32xf32, #tpu.memory_space<vmem>>, vector<16x32xf32>,
    } else {
    }
    return
  }
  func.func @transform_0(%arg0: i32, %arg1: i32, %arg2: i32) -> (i32, i32) {
    %c0_i32 = arith.constant 0 : i32
    return %arg0, %arg2 : i32, i32
  }
  func.func @transform_1(%arg0: i32, %arg1: i32, %arg2: i32) -> (i32, i32) {
    %c0_i32 = arith.constant 0 : i32
    return %arg2, %arg1 : i32, i32
  }
  func.func @transform_2(%arg0: i32, %arg1: i32, %arg2: i32) -> (i32, i32) {
    %c0_i32 = arith.constant 0 : i32
    %c0_i32_0 = arith.constant 0 : i32
    return %arg2, %c0_i32 : i32, i32
  }
  func.func @transform_3(%arg0: i32, %arg1: i32, %arg2: i32) -> (i32, i32) {
    %c0_i32 = arith.constant 0 : i32
    %c0_i32_0 = arith.constant 0 : i32
    return %c0_i32, %arg1 : i32, i32
  }
  func.func @transform_4(%arg0: i32, %arg1: i32, %arg2: i32) -> (i32, i32) {
    %c0_i32 = arith.constant 0 : i32
    %c0_i32_0 = arith.constant 0 : i32
    return %c0_i32, %arg1 : i32, i32
  }
  func.func @transform_5(%arg0: i32, %arg1: i32, %arg2: i32) -> (i32, i32) {
    %c0_i32 = arith.constant 0 : i32
    return %arg0, %arg1 : i32, i32
  }
}

</mosaic_0001>

<llo_original>
// kernel: tpu_custom_call.1
$region0: #{tpu_custom_call.1}
  #allocation0 [shape = 'u32[]', space=smem, size = 0x4, offset = 0x4, fixed_abs, tag = 'smem constant byte address 0x4 - core index']
  #allocation1 [shape = 'u32[144,128]{1,0:T(1,128)}', space=vmem, size = 0x12000, scoped, tag = 'internal scratch']
  #allocation2 [shape = 'f32[16,8]{1,0:T(8,128)}', space=vmem, size = 0x2000, scoped, tag = 'scratch operand']
  %s0 = inlined_call_operand.hbm [shape: f32[16,32], index: 0, kind: input, shape index: {}]
  %s1 = inlined_call_operand.vmem [shape: f32[32,32], index: 1, kind: input, shape index: {}]
  %s2 = inlined_call_operand.vmem [shape: f32[32,8], index: 2, kind: input, shape index: {}]
  %s3 = inlined_call_operand.vmem [shape: f32[8,32], index: 3, kind: input, shape index: {}]
  %s4 = inlined_call_operand.vmem [shape: f32[1,32], index: 4, kind: input, shape index: {}]
  %s5 = inlined_call_operand.hbm [shape: f32[16,32], index: 5, kind: output, shape index: {}]
  %s6 = sld [smem:[#allocation0]]
  $region50: #{tpu_custom_call.1} parent=0
    _
  %s8 = ssub.s32 1, %s6
  %s9 = scalar_select 0, %s8, %s6
  $region1: #{tpu_custom_call.1} parent=0
    #allocation3 [shape = 'u8[8192]{0}', space=vmem, size = 0x2000, scoped, tag = 'input window, operand 0, single buffered']
    #allocation4 [shape = 's32[1]{0}', space=sflag, size = 0x4, scoped, tag = 'scoped memory for tpu_custom_call.1']
    #allocation5 [shape = 's32[1]{0}', space=sflag, size = 0x4, scoped, tag = 'scoped memory for tpu_custom_call.1']
    #allocation6 [shape = 'u8[8192]{0}', space=vmem, size = 0x2000, scoped, tag = 'output window, operand 0, single buffered']
    %10 = vsyncpa [#allocation4], 0
    %11 = vsyncpa [#allocation5], 0
    // Predicated region
    $region2: #{tpu_custom_call.1} parent=1 // pred_check
      _
    $region3: #{tpu_custom_call.1} parent=1 // pred_check_branch
      %13 = sbr.rel (0) target = $region5
    $region4: #{tpu_custom_call.1} parent=1 // pred_region
      %s15 = ssub.s32 256, 256
      %16 = vsyncadd [#allocation4], %s15
      %s17 = sshll.u32 [#allocation3], 4
      %s18 = int_to_ptr.vmem [resolvable:$true] %s17
      %23 = dma.hbm_to_vmem [thread:$0]  %s0, 256, %s18, [#allocation4], 128, 128, 8
    $region5: #{tpu_custom_call.1} parent=1 // pred_fallthru
      _
    // Predicated region
    $region6: #{tpu_custom_call.1} parent=1 // pred_check
      _
    $region7: #{tpu_custom_call.1} parent=1 // pred_check_branch
      %25 = sbr.rel (0) target = $region9
    $region8: #{tpu_custom_call.1} parent=1 // pred_region
      _
    $region9: #{tpu_custom_call.1} parent=1 // pred_fallthru
      _
    // Predicated region
    $region10: #{tpu_custom_call.1} parent=1 // pred_check
      _
    $region11: #{tpu_custom_call.1} parent=1 // pred_check_branch
      %27 = sbr.rel (0) target = $region13
    $region12: #{tpu_custom_call.1} parent=1 // pred_region
      _
    $region13: #{tpu_custom_call.1} parent=1 // pred_fallthru
      _
    // Predicated region
    $region14: #{tpu_custom_call.1} parent=1 // pred_check
      _
    $region15: #{tpu_custom_call.1} parent=1 // pred_check_branch
      %29 = sbr.rel (0) target = $region17
    $region16: #{tpu_custom_call.1} parent=1 // pred_region
      _
    $region17: #{tpu_custom_call.1} parent=1 // pred_fallthru
      _
    // Predicated region
    $region18: #{tpu_custom_call.1} parent=1 // pred_check
      _
    $region19: #{tpu_custom_call.1} parent=1 // pred_check_branch
      %31 = sbr.rel (0) target = $region21
    $region20: #{tpu_custom_call.1} parent=1 // pred_region
      _
    $region21: #{tpu_custom_call.1} parent=1 // pred_fallthru
      _
    // Predicated region
    $region22: #{tpu_custom_call.1} parent=1 // pred_check
      _
    $region23: #{tpu_custom_call.1} parent=1 // pred_check_branch
      %33 = sbr.rel (0) target = $region25
    $region24: #{tpu_custom_call.1} parent=1 // pred_region
      %34 = dma.done [#allocation4], 256
    $region25: #{tpu_custom_call.1} parent=1 // pred_fallthru
      _
    %v35 = vld [vmem:[#allocation3] sm:$0xff]
    %v36 = vld [vmem:[#allocation3 + $0x8] sm:$0xff]
    %v37 = vld [vmem:[%s1] sm:$0xff]
    %v38 = vld [vmem:[%s1 + $0x8] sm:$0xff]
    %v39 = vld [vmem:[%s1 + $0x10] sm:$0xff]
    %v40 = vld [vmem:[%s1 + $0x18] sm:$0xff]
    %v41 = vld [vmem:[%s2] sm:$0xff]
    %v42 = vld [vmem:[%s2 + $0x8] sm:$0xff]
    %v43 = vld [vmem:[%s2 + $0x10] sm:$0xff]
    %v44 = vld [vmem:[%s2 + $0x18] sm:$0xff]
    %p45 = scmp.eq.s32.totalorder 0, 0
    // Predicated region
    $region26: #{tpu_custom_call.1} parent=1 // pred_check
      %p46 = pneg %p45
    $region27: #{tpu_custom_call.1} parent=1 // pred_check_branch
      %48 = sbr.rel (%p46) target = $region29
    $region28: #{tpu_custom_call.1} parent=1 // pred_region
      %v49 = vld [vmem:[%s4] sm:$0x1]
      %v51 = vlaneseq
      %v52 = vshrl.u32 %v51, 7
      %v53 = vsub.s32 0, %v52
      %v54 = vrot.slane %v49, %v53
      %vm56 = vcmask 261120
      %57 = vst.msk [vmem:[#allocation6] sm:$0xff] %vm56, %v54
      %58 = vst.msk [vmem:[#allocation6 + $0x8] sm:$0xff] %vm56, %v54
    $region29: #{tpu_custom_call.1} parent=1 // pred_fallthru
      _
    %p59 = scmp.eq.s32.totalorder 0, 0
    %p60 = pnand %p59, %p45
    %p61 = pneg %p60
    // Predicated region
    $region30: #{tpu_custom_call.1} parent=1 // pred_check
      _
    $region31: #{tpu_custom_call.1} parent=1 // pred_check_branch
      %63 = sbr.rel (%p60) target = $region33
    $region32: #{tpu_custom_call.1} parent=1 // pred_region
      %vm64 = vcmask 64512
      %65 = vst.msk [vmem:[#allocation2] sm:$0xff] %vm64, 0.0
      %66 = vst.msk [vmem:[#allocation2 + $0x8] sm:$0xff] %vm64, 0.0
    $region33: #{tpu_custom_call.1} parent=1 // pred_fallthru
      _
    %v67 = vld [vmem:[#allocation6] sm:$0xff]
    %v68 = vld [vmem:[#allocation6 + $0x8] sm:$0xff]
    %vm69 = vcmask 261120
    %v71 = vsel %vm69, %v35, 0
    %v74 = vsel %vm69, %v36, 0
    %76 = vmatprep.subr.mxu0 0.0
    %77 = vmatpush1.msra.mxu0 0.0
    %78 = vmatprep.subr.mxu0 0.0
    %79 = vmatpush1.msra.mxu0 0.0
    %80 = vmatprep.subr.mxu0 0.0
    %81 = vmatpush1.msra.mxu0 0.0
    %82 = vmatprep.subr.mxu0 0.0
    %83 = vmatpush1.msra.mxu0 0.0
    %84 = vmatprep.subr.mxu0 0.0
    %85 = vmatpush1.msra.mxu0 0.0
    %86 = vmatprep.subr.mxu0 0.0
    %87 = vmatpush1.msra.mxu0 0.0
    %88 = vmatprep.subr.mxu0 0.0
    %89 = vmatpush1.msra.mxu0 0.0
    %90 = vmatprep.subr.mxu0 0.0
    %91 = vmatpush1.msra.mxu0 0.0
    %92 = vmatprep.subr.mxu0 0.0
    %93 = vmatpush1.msra.mxu0 0.0
    %94 = vmatprep.subr.mxu0 0.0
    %95 = vmatpush1.msra.mxu0 0.0
    %96 = vmatprep.subr.mxu0 0.0
    %97 = vmatpush1.msra.mxu0 0.0
    %98 = vmatprep.subr.mxu0 0.0
    %99 = vmatpush1.msra.mxu0 0.0
    %100 = vmatprep.subr.mxu0 0.0
    %101 = vmatpush1.msra.mxu0 %v40
    %102 = vmatprep.subr.mxu0 0.0
    %103 = vmatpush1.msra.mxu0 %v39
    %104 = vmatprep.subr.mxu0 0.0
    %105 = vmatpush1.msra.mxu0 %v38
    %106 = vmatprep.subr.mxu0 0.0
    %107 = vmatpush1.msra.mxu0 %v37
    %108 = vmatprep.subr.mxu0 0.0
    %109 = vmatpush2.msra.mxu0 0.0
    %110 = vmatprep.subr.mxu0 0.0
    %111 = vmatpush2.msra.mxu0 0.0
    %112 = vmatprep.subr.mxu0 0.0
    %113 = vmatpush2.msra.mxu0 0.0
    %114 = vmatprep.subr.mxu0 0.0
    %115 = vmatpush2.msra.mxu0 0.0
    %116 = vmatprep.subr.mxu0 0.0
    %117 = vmatpush2.msra.mxu0 0.0
    %118 = vmatprep.subr.mxu0 0.0
    %119 = vmatpush2.msra.mxu0 0.0
    %120 = vmatprep.subr.mxu0 0.0
    %121 = vmatpush2.msra.mxu0 0.0
    %122 = vmatprep.subr.mxu0 0.0
    %123 = vmatpush2.msra.mxu0 0.0
    %124 = vmatprep.subr.mxu0 0.0
    %125 = vmatpush2.msra.mxu0 0.0
    %126 = vmatprep.subr.mxu0 0.0
    %127 = vmatpush2.msra.mxu0 0.0
    %128 = vmatprep.subr.mxu0 0.0
    %129 = vmatpush2.msra.mxu0 0.0
    %130 = vmatprep.subr.mxu0 0.0
    %131 = vmatpush2.msra.mxu0 0.0
    %132 = vmatprep.subr.mxu0 0.0
    %133 = vmatpush2.msra.mxu0 0.0
    %134 = vmatprep.subr.mxu0 0.0
    %135 = vmatpush2.msra.mxu0 0.0
    %136 = vmatprep.subr.mxu0 0.0
    %137 = vmatpush2.msra.mxu0 0.0
    %138 = vmatprep.subr.mxu0 0.0
    %139 = vmatpush2.msra.mxu0 0.0
    %140 = vmatprep.mubr.f32.mxu0 0.0
    %141 = vmatmul.mubr.f32.gmra.mxu0 %v71
    %v142 = vpop.f32.mrf.mxu0
    %v143 = vadd.f32 0.0, %v142
    %v144 = vpop.f32.mrf.mxu0
    %145 = vmatprep.mubr.f32.mxu0 0.0
    %146 = vmatmul.mubr.f32.gmra.mxu0 %v74
    %v147 = vpop.f32.mrf.mxu0
    %v148 = vadd.f32 0.0, %v147
    %v149 = vpop.f32.mrf.mxu0
    %150 = vdwg.mxu0
    %v151 = vadd.f32 %v67, %v143
    %v152 = vadd.f32 %v68, %v148
    %153 = vst.msk [vmem:[#allocation6] sm:$0xff] %vm69, %v151
    %154 = vst.msk [vmem:[#allocation6 + $0x8] sm:$0xff] %vm69, %v152
    // Predicated region
    $region34: #{tpu_custom_call.1} parent=1 // pred_check
      %p155 = pneg %p59
    $region35: #{tpu_custom_call.1} parent=1 // pred_check_branch
      %157 = sbr.rel (%p155) target = $region37
    $region36: #{tpu_custom_call.1} parent=1 // pred_region
      %v158 = vld [vmem:[#allocation2] sm:$0xff]
      %v159 = vld [vmem:[#allocation2 + $0x8] sm:$0xff]
      %160 = vmatprep.subr.mxu0 0.0
      %161 = vmatpush1.msra.mxu0 0.0
      %162 = vmatprep.subr.mxu0 0.0
      %163 = vmatpush1.msra.mxu0 0.0
      %164 = vmatprep.subr.mxu0 0.0
      %165 = vmatpush1.msra.mxu0 0.0
      %166 = vmatprep.subr.mxu0 0.0
      %167 = vmatpush1.msra.mxu0 0.0
      %168 = vmatprep.subr.mxu0 0.0
      %169 = vmatpush1.msra.mxu0 0.0
      %170 = vmatprep.subr.mxu0 0.0
      %171 = vmatpush1.msra.mxu0 0.0
      %172 = vmatprep.subr.mxu0 0.0
      %173 = vmatpush1.msra.mxu0 0.0
      %174 = vmatprep.subr.mxu0 0.0
      %175 = vmatpush1.msra.mxu0 0.0
      %176 = vmatprep.subr.mxu0 0.0
      %177 = vmatpush1.msra.mxu0 0.0
      %178 = vmatprep.subr.mxu0 0.0
      %179 = vmatpush1.msra.mxu0 0.0
      %180 = vmatprep.subr.mxu0 0.0
      %181 = vmatpush1.msra.mxu0 0.0
      %182 = vmatprep.subr.mxu0 0.0
      %183 = vmatpush1.msra.mxu0 0.0
      %184 = vmatprep.subr.mxu0 0.0
      %185 = vmatpush1.msra.mxu0 %v44
      %186 = vmatprep.subr.mxu0 0.0
      %187 = vmatpush1.msra.mxu0 %v43
      %188 = vmatprep.subr.mxu0 0.0
      %189 = vmatpush1.msra.mxu0 %v42
      %190 = vmatprep.subr.mxu0 0.0
      %191 = vmatpush1.msra.mxu0 %v41
      %192 = vmatprep.subr.mxu0 0.0
      %193 = vmatpush2.msra.mxu0 0.0
      %194 = vmatprep.subr.mxu0 0.0
      %195 = vmatpush2.msra.mxu0 0.0
      %196 = vmatprep.subr.mxu0 0.0
      %197 = vmatpush2.msra.mxu0 0.0
      %198 = vmatprep.subr.mxu0 0.0
      %199 = vmatpush2.msra.mxu0 0.0
      %200 = vmatprep.subr.mxu0 0.0
      %201 = vmatpush2.msra.mxu0 0.0
      %202 = vmatprep.subr.mxu0 0.0
      %203 = vmatpush2.msra.mxu0 0.0
      %204 = vmatprep.subr.mxu0 0.0
      %205 = vmatpush2.msra.mxu0 0.0
      %206 = vmatprep.subr.mxu0 0.0
      %207 = vmatpush2.msra.mxu0 0.0
      %208 = vmatprep.subr.mxu0 0.0
      %209 = vmatpush2.msra.mxu0 0.0
      %210 = vmatprep.subr.mxu0 0.0
      %211 = vmatpush2.msra.mxu0 0.0
      %212 = vmatprep.subr.mxu0 0.0
      %213 = vmatpush2.msra.mxu0 0.0
      %214 = vmatprep.subr.mxu0 0.0
      %215 = vmatpush2.msra.mxu0 0.0
      %216 = vmatprep.subr.mxu0 0.0
      %217 = vmatpush2.msra.mxu0 0.0
      %218 = vmatprep.subr.mxu0 0.0
      %219 = vmatpush2.msra.mxu0 0.0
      %220 = vmatprep.subr.mxu0 0.0
      %221 = vmatpush2.msra.mxu0 0.0
      %222 = vmatprep.subr.mxu0 0.0
      %223 = vmatpush2.msra.mxu0 0.0
      %224 = vmatprep.mubr.f32.mxu0 0.0
      %225 = vmatmul.mubr.f32.gmra.mxu0 %v71
      %v226 = vpop.f32.mrf.mxu0
      %v227 = vadd.f32 0.0, %v226
      %v228 = vpop.f32.mrf.mxu0
      %229 = vmatprep.mubr.f32.mxu0 0.0
      %230 = vmatmul.mubr.f32.gmra.mxu0 %v74
      %v231 = vpop.f32.mrf.mxu0
      %v232 = vadd.f32 0.0, %v231
      %v233 = vpop.f32.mrf.mxu0
      %234 = vdwg.mxu0
      %v235 = vadd.f32 %v158, %v227
      %v236 = vadd.f32 %v159, %v232
      %vm237 = vcmask 64512
      %238 = vst.msk [vmem:[#allocation2] sm:$0xff] %vm237, %v235
      %239 = vst.msk [vmem:[#allocation2 + $0x8] sm:$0xff] %vm237, %v236
    $region37: #{tpu_custom_call.1} parent=1 // pred_fallthru
      _
    // Predicated region
    $region38: #{tpu_custom_call.1} parent=1 // pred_check
      %p240 = pneg %p45
    $region39: #{tpu_custom_call.1} parent=1 // pred_check_branch
      %242 = sbr.rel (%p240) target = $region41
    $region40: #{tpu_custom_call.1} parent=1 // pred_region
      %v243 = vld [vmem:[#allocation2] sm:$0xff]
      %v244 = vld [vmem:[#allocation2 + $0x8] sm:$0xff]
      %v245 = vmul.f32 %v243, 0.125
      %v246 = vmul.f32 %v244, 0.125
      %v247 = vld [vmem:[%s3] sm:$0xff]
      %vm248 = vcmask 64512
      %v250 = vsel %vm248, %v245, 0
      %v253 = vsel %vm248, %v246, 0
      %255 = vmatprep.subr.mxu0 0.0
      %256 = vmatpush1.msra.mxu0 0.0
      %257 = vmatprep.subr.mxu0 0.0
      %258 = vmatpush1.msra.mxu0 0.0
      %259 = vmatprep.subr.mxu0 0.0
      %260 = vmatpush1.msra.mxu0 0.0
      %261 = vmatprep.subr.mxu0 0.0
      %262 = vmatpush1.msra.mxu0 0.0
      %263 = vmatprep.subr.mxu0 0.0
      %264 = vmatpush1.msra.mxu0 0.0
      %265 = vmatprep.subr.mxu0 0.0
      %266 = vmatpush1.msra.mxu0 0.0
      %267 = vmatprep.subr.mxu0 0.0
      %268 = vmatpush1.msra.mxu0 0.0
      %269 = vmatprep.subr.mxu0 0.0
      %270 = vmatpush1.msra.mxu0 0.0
      %271 = vmatprep.subr.mxu0 0.0
      %272 = vmatpush1.msra.mxu0 0.0
      %273 = vmatprep.subr.mxu0 0.0
      %274 = vmatpush1.msra.mxu0 0.0
      %275 = vmatprep.subr.mxu0 0.0
      %276 = vmatpush1.msra.mxu0 0.0
      %277 = vmatprep.subr.mxu0 0.0
      %278 = vmatpush1.msra.mxu0 0.0
      %279 = vmatprep.subr.mxu0 0.0
      %280 = vmatpush1.msra.mxu0 0.0
      %281 = vmatprep.subr.mxu0 0.0
      %282 = vmatpush1.msra.mxu0 0.0
      %283 = vmatprep.subr.mxu0 0.0
      %284 = vmatpush1.msra.mxu0 0.0
      %285 = vmatprep.subr.mxu0 0.0
      %286 = vmatpush1.msra.mxu0 %v247
      %287 = vmatprep.subr.mxu0 0.0
      %288 = vmatpush2.msra.mxu0 0.0
      %289 = vmatprep.subr.mxu0 0.0
      %290 = vmatpush2.msra.mxu0 0.0
      %291 = vmatprep.subr.mxu0 0.0
      %292 = vmatpush2.msra.mxu0 0.0
      %293 = vmatprep.subr.mxu0 0.0
      %294 = vmatpush2.msra.mxu0 0.0
      %295 = vmatprep.subr.mxu0 0.0
      %296 = vmatpush2.msra.mxu0 0.0
      %297 = vmatprep.subr.mxu0 0.0
      %298 = vmatpush2.msra.mxu0 0.0
      %299 = vmatprep.subr.mxu0 0.0
      %300 = vmatpush2.msra.mxu0 0.0
      %301 = vmatprep.subr.mxu0 0.0
      %302 = vmatpush2.msra.mxu0 0.0
      %303 = vmatprep.subr.mxu0 0.0
      %304 = vmatpush2.msra.mxu0 0.0
      %305 = vmatprep.subr.mxu0 0.0
      %306 = vmatpush2.msra.mxu0 0.0
      %307 = vmatprep.subr.mxu0 0.0
      %308 = vmatpush2.msra.mxu0 0.0
      %309 = vmatprep.subr.mxu0 0.0
      %310 = vmatpush2.msra.mxu0 0.0
      %311 = vmatprep.subr.mxu0 0.0
      %312 = vmatpush2.msra.mxu0 0.0
      %313 = vmatprep.subr.mxu0 0.0
      %314 = vmatpush2.msra.mxu0 0.0
      %315 = vmatprep.subr.mxu0 0.0
      %316 = vmatpush2.msra.mxu0 0.0
      %317 = vmatprep.subr.mxu0 0.0
      %318 = vmatpush2.msra.mxu0 0.0
      %319 = vmatprep.mubr.f32.mxu0 0.0
      %320 = vmatmul.mubr.f32.gmra.mxu0 %v250
      %v321 = vpop.f32.mrf.mxu0
      %v322 = vadd.f32 0.0, %v321
      %v323 = vpop.f32.mrf.mxu0
      %324 = vmatprep.mubr.f32.mxu0 0.0
      %325 = vmatmul.mubr.f32.gmra.mxu0 %v253
      %v326 = vpop.f32.mrf.mxu0
      %v327 = vadd.f32 0.0, %v326
      %v328 = vpop.f32.mrf.mxu0
      %329 = vdwg.mxu0
      %v330 = vld [vmem:[#allocation6] sm:$0xff]
      %v331 = vld [vmem:[#allocation6 + $0x8] sm:$0xff]
      %v332 = vadd.f32 %v330, %v322
      %v333 = vadd.f32 %v331, %v327
      %334 = vst.msk [vmem:[#allocation6] sm:$0xff] %vm69, %v332
      %335 = vst.msk [vmem:[#allocation6 + $0x8] sm:$0xff] %vm69, %v333
    $region41: #{tpu_custom_call.1} parent=1 // pred_fallthru
      _
    // Predicated region
    $region42: #{tpu_custom_call.1} parent=1 // pred_check
      _
    $region43: #{tpu_custom_call.1} parent=1 // pred_check_branch
      %337 = sbr.rel (0) target = $region45
    $region44: #{tpu_custom_call.1} parent=1 // pred_region
      %s339 = ssub.s32 256, 256
      %340 = vsyncadd [#allocation5], %s339
      %s341 = sshll.u32 [#allocation6], 4
      %s342 = int_to_ptr.vmem [resolvable:$true] %s341
      %347 = dma.vmem_to_hbm [thread:$0]  %s342, 256, %s5, [#allocation5], 128, 128, 8
    $region45: #{tpu_custom_call.1} parent=1 // pred_fallthru
      _
    // Predicated region
    $region46: #{tpu_custom_call.1} parent=1 // pred_check
      _
    $region47: #{tpu_custom_call.1} parent=1 // pred_check_branch
      %349 = sbr.rel (0) target = $region49
    $region48: #{tpu_custom_call.1} parent=1 // pred_region
      %350 = dma.done [#allocation5], 256
    $region49: #{tpu_custom_call.1} parent=1 // pred_fallthru
      _
    %351 = vsyncpa [#allocation4], 1
    %352 = vsyncpa [#allocation5], 1

</llo_original>
